<compile_context>
chip_gen: v7x
topology: tpu7x:2x2x1
jax: 0.10.0
libtpu: 0.0.40
codegen_flags: <defaults>
</compile_context>

<pallas_src>
import functools

import jax
import jax.numpy as jnp
from jax.experimental import pallas as pl
from jax.experimental.pallas import tpu as pltpu

LANES = 128
SUBLANES = 8
MAX_TILE_SUPER_ROWS = 512   # 512 * 8 * 128 f32 = 2 MiB per input buffer (x2 bufs x2 inputs = 8 MiB)


def _bce_kernel(x_ref, t_ref, o_ref, acc_ref, *, n_elems):
    r8, sub, lanes = x_ref.shape
    elems_per_tile = r8 * sub * lanes
    s = pl.program_id(0)
    i = pl.program_id(1)
    n_inner = pl.num_programs(1)

    @pl.when(i == 0)
    def _():
        acc_ref[...] = jnp.zeros_like(acc_ref)

    x = x_ref[...].astype(jnp.float32)
    t = t_ref[...].astype(jnp.float32)

    # Numerically stable logits-form BCE (one exp + one log1p per element):
    #   log(sigmoid(x))     = (x - relu(x)) - log1p(exp(-|x|))
    #   log(1 - sigmoid(x)) =     -relu(x)  - log1p(exp(-|x|))
    # PyTorch's F.binary_cross_entropy clamps each log term at -100, preserved here.
    # Factored loss = -(log_1mp + t * (log_p - log_1mp)) saves one sub + one mul per element.
    relu = jnp.maximum(x, 0.0)
    softplus = jnp.log1p(jnp.exp(-jnp.abs(x)))        # EUP work, off the VALU slot
    log_p = jnp.maximum(x - relu - softplus, -100.0)
    log_1mp = jnp.maximum(-relu - softplus, -100.0)
    loss = -(log_1mp + t * (log_p - log_1mp))

    # Scalar validity bookkeeping (int32; fine for < 2**31 elements).
    # TODO(synk): switch to per-row offset comparisons if inputs can exceed ~2.1e9 elements.
    block_linear = s * n_inner + i
    rem = n_elems - block_linear * elems_per_tile
    is_full = rem >= elems_per_tile

    @pl.when(is_full)
    def _():
        # Hot path: every grid step except (at most) one ragged tile per split.
        # Sum over the leading (non-tiled) axis = pure VPU vreg adds, no XLU.
        acc_ref[...] += jnp.sum(loss, axis=0)

    @pl.when(jnp.logical_not(is_full))
    def _():
        # Ragged last tile / duplicated clamped tile: build the element mask only here.
        sup = jax.lax.broadcasted_iota(jnp.int32, (r8, sub, lanes), 0)
        row = jax.lax.broadcasted_iota(jnp.int32, (r8, sub, lanes), 1)
        lane = jax.lax.broadcasted_iota(jnp.int32, (r8, sub, lanes), 2)
        local_idx = (sup * sub + row) * lanes + lane
        acc_ref[...] += jnp.sum(jnp.where(local_idx < rem, loss, 0.0), axis=0)

    @pl.when(i == n_inner - 1)
    def _():
        # Per-split per-lane partial sums; single sublane reduction per split.
        # Final lane-sum + divide-by-N happen in the wrapper.
        o_ref[...] = jnp.sum(acc_ref[...], axis=0, keepdims=True)[None]


def _num_splits_for_device() -> int:
    # Only v7x has 2 TensorCores per chip; single-TC chips gain nothing from a 2-way split.
    # TODO(synk): on v7x, verify in xprof that the "parallel" leading axis actually shards
    # across both TensorCores; if not, drive it with pltpu.CORE_PARALLEL / pl.core_map.
    try:
        kind = jax.devices()[0].device_kind.lower()
    except Exception:
        return 1
    return 2 if "v7" in kind else 1


def bce_loss(inputs: jax.Array, targets: jax.Array, smooth: float = 1.0) -> jax.Array:
    """Matches BCELoss.forward: mean BCE over sigmoid(input) vs target (smooth unused)."""
    del smooth  # unused in the reference forward as well
    n = inputs.size
    assert targets.size == n and n > 0

    x_flat = jnp.ravel(inputs)
    t_flat = jnp.ravel(targets)

    # Stream common floating dtypes as-is (cast happens in-kernel); only widen
    # non-float / exotic dtypes so the kernel never has to lower them directly.
    def _streamable(a):
        if a.dtype in (jnp.dtype(jnp.float32), jnp.dtype(jnp.bfloat16)):
            return a
        return a.astype(jnp.float32)

    x_flat = _streamable(x_flat)
    t_flat = _streamable(t_flat)

    # Pad to a whole (8, 128) tile; a no-op for typical NCHW sizes.
    # TODO(synk): for very large non-aligned inputs this pad is an extra HBM pass; a
    # prefix/tail split would avoid it.
    tile_elems = SUBLANES * LANES
    pad = (-n) % tile_elems
    if pad:
        x_flat = jnp.pad(x_flat, (0, pad))
        t_flat = jnp.pad(t_flat, (0, pad))
    rows8 = (n + pad) // tile_elems

    x3 = x_flat.reshape(rows8, SUBLANES, LANES)
    t3 = t_flat.reshape(rows8, SUBLANES, LANES)

    tile_r8 = min(MAX_TILE_SUPER_ROWS, rows8)
    total_blocks = pl.cdiv(rows8, tile_r8)
    num_splits = min(_num_splits_for_device(), total_blocks)
    steps = pl.cdiv(total_blocks, num_splits)

    def in_map(s, i):
        # Clamp so the DMA never targets a block index past the grid extent; the in-kernel
        # predicate zeroes any duplicated (logically out-of-range) tile's contribution.
        return (jnp.minimum(s * steps + i, total_blocks - 1), 0, 0)

    tile_spec = pl.BlockSpec((tile_r8, SUBLANES, LANES), in_map)

    partials = pl.pallas_call(
        functools.partial(_bce_kernel, n_elems=n),
        out_shape=jax.ShapeDtypeStruct((num_splits, 1, LANES), jnp.float32),
        grid_spec=pltpu.PrefetchScalarGridSpec(
            num_scalar_prefetch=0,
            grid=(num_splits, steps),
            in_specs=[tile_spec, tile_spec],
            out_specs=pl.BlockSpec((1, 1, LANES), lambda s, i: (s, 0, 0)),
            scratch_shapes=[pltpu.VMEM((SUBLANES, LANES), jnp.float32)],
        ),
        compiler_params=pltpu.CompilerParams(
            dimension_semantics=("parallel", "arbitrary"),
        ),
    )(x3, t3)

    return jnp.sum(partials) / jnp.float32(n)


if __name__ == "__main__":
    key = jax.random.PRNGKey(0)
    k1, k2 = jax.random.split(key)

    # Small NCHW-style shapes (module is shape-agnostic; it flattens everything).
    x = jax.random.normal(k1, (2, 4, 16, 16), dtype=jnp.float32)                  # logits
    tgt = (jax.random.uniform(k2, (2, 4, 16, 16)) > 0.5).astype(jnp.float32)      # binary targets

    loss = bce_loss(x, tgt)
    jax.block_until_ready(loss)

    # Reference check in plain JAX (same math as torch.nn.functional.binary_cross_entropy).
    p = jax.nn.sigmoid(x.ravel())
    ref = jnp.mean(
        -(tgt.ravel() * jnp.maximum(jnp.log(p), -100.0)
          + (1.0 - tgt.ravel()) * jnp.maximum(jnp.log1p(-p), -100.0))
    )
    assert jnp.allclose(loss, ref, rtol=1e-5, atol=1e-5), (loss, ref)

    print("KERNEL_OK")
</pallas_src>

<mosaic_0001>
module attributes {stable_mosaic.version = 11 : i64} {
  func.func @_bce_kernel(%arg0: i32, %arg1: i32, %arg2: memref<2x8x128xf32, #tpu.memory_space<vmem>>, %arg3: memref<2x8x128xf32, #tpu.memory_space<vmem>>, %arg4: memref<1x1x128xf32, #tpu.memory_space<vmem>>, %arg5: memref<8x128xf32, #tpu.memory_space<vmem>>) attributes {dimension_semantics = [#tpu.dimension_semantics<parallel>, #tpu.dimension_semantics<arbitrary>], iteration_bounds = array<i64: 1, 1>, scalar_prefetch = 0 : i64, scratch_operands = 1 : i64, tpu.core_type = #tpu.core_type<tc>, window_params = [{transform_indices = @transform_0, window_bounds = array<i64: 2, 8, 128>}, {transform_indices = @transform_1, window_bounds = array<i64: 2, 8, 128>}, {transform_indices = @transform_2, window_bounds = array<i64: 1, 1, 128>}]} {
    %c0_i32 = arith.constant 0 : i32
    %0 = arith.cmpi eq, %arg1, %c0_i32 : i32
    %1 = arith.extui %0 : i1 to i32
    %c0_i32_0 = arith.constant 0 : i32
    %2 = arith.cmpi ne, %1, %c0_i32_0 : i32
    scf.if %2 {
      %cst_17 = arith.constant 0.000000e+00 : f32
      %39 = vector.broadcast %cst_17 : f32 to vector<8x128xf32>
      %c0_18 = arith.constant 0 : index
      %c0_19 = arith.constant 0 : index
      %40 = vector.load %arg5[%c0_18, %c0_19] : memref<8x128xf32, #tpu.memory_space<vmem>>, vector<8x128xf32>
      tpu.vector_store %arg5[%c0_18, %c0_19], %39 {strides = array<i32>} : memref<8x128xf32, #tpu.memory_space<vmem>>, vector<8x128xf32>,
    } else {
    }
    %c0 = arith.constant 0 : index
    %c0_1 = arith.constant 0 : index
    %c0_2 = arith.constant 0 : index
    %3 = vector.load %arg2[%c0, %c0_1, %c0_2] : memref<2x8x128xf32, #tpu.memory_space<vmem>>, vector<2x8x128xf32>
    %c0_3 = arith.constant 0 : index
    %c0_4 = arith.constant 0 : index
    %c0_5 = arith.constant 0 : index
    %4 = vector.load %arg3[%c0_3, %c0_4, %c0_5] : memref<2x8x128xf32, #tpu.memory_space<vmem>>, vector<2x8x128xf32>
    %cst = arith.constant 0.000000e+00 : f32
    %5 = vector.broadcast %cst : f32 to vector<2x8x128xf32>
    %6 = arith.maximumf %3, %5 : vector<2x8x128xf32>
    %7 = math.absf %3 : vector<2x8x128xf32>
    %cst_6 = arith.constant 0.000000e+00 : f32
    %8 = vector.broadcast %cst_6 : f32 to vector<2x8x128xf32>
    %9 = arith.subf %8, %7 : vector<2x8x128xf32>
    %10 = math.exp %9 : vector<2x8x128xf32>
    %11 = math.log1p %10 : vector<2x8x128xf32>
    %12 = arith.subf %3, %6 : vector<2x8x128xf32>
    %13 = arith.subf %12, %11 : vector<2x8x128xf32>
    %cst_7 = arith.constant -1.000000e+02 : f32
    %14 = vector.broadcast %cst_7 : f32 to vector<2x8x128xf32>
    %15 = arith.maximumf %13, %14 : vector<2x8x128xf32>
    %cst_8 = arith.constant 0.000000e+00 : f32
    %16 = vector.broadcast %cst_8 : f32 to vector<2x8x128xf32>
    %17 = arith.subf %16, %6 : vector<2x8x128xf32>
    %18 = arith.subf %17, %11 : vector<2x8x128xf32>
    %cst_9 = arith.constant -1.000000e+02 : f32
    %19 = vector.broadcast %cst_9 : f32 to vector<2x8x128xf32>
    %20 = arith.maximumf %18, %19 : vector<2x8x128xf32>
    %21 = arith.subf %15, %20 : vector<2x8x128xf32>
    %22 = arith.mulf %4, %21 : vector<2x8x128xf32>
    %23 = arith.addf %20, %22 : vector<2x8x128xf32>
    %cst_10 = arith.constant 0.000000e+00 : f32
    %24 = vector.broadcast %cst_10 : f32 to vector<2x8x128xf32>
    %25 = arith.subf %24, %23 : vector<2x8x128xf32>
    %c1_i32 = arith.constant 1 : i32
    %26 = arith.muli %arg0, %c1_i32 : i32
    %27 = arith.addi %26, %arg1 : i32
    %c2048_i32 = arith.constant 2048 : i32
    %28 = arith.muli %27, %c2048_i32 : i32
    %c2048_i32_11 = arith.constant 2048 : i32
    %29 = arith.subi %c2048_i32_11, %28 : i32
    %c2048_i32_12 = arith.constant 2048 : i32
    %30 = arith.cmpi sge, %29, %c2048_i32_12 : i32
    %31 = arith.extui %30 : i1 to i32
    %c0_i32_13 = arith.constant 0 : i32
    %32 = arith.cmpi ne, %31, %c0_i32_13 : i32
    scf.if %32 {
      %c0_17 = arith.constant 0 : index
      %c0_18 = arith.constant 0 : index
      %39 = vector.load %arg5[%c0_17, %c0_18] : memref<8x128xf32, #tpu.memory_space<vmem>>, vector<8x128xf32>
      %cst_19 = arith.constant dense<0.000000e+00> : vector<8x128xf32>
      %40 = vector.multi_reduction <add>, %25, %cst_19 [0] : vector<2x8x128xf32> to vector<8x128xf32>
      %41 = arith.addf %39, %40 : vector<8x128xf32>
      %c0_20 = arith.constant 0 : index
      %c0_21 = arith.constant 0 : index
      %42 = vector.load %arg5[%c0_20, %c0_21] : memref<8x128xf32, #tpu.memory_space<vmem>>, vector<8x128xf32>
      tpu.vector_store %arg5[%c0_20, %c0_21], %41 {strides = array<i32>} : memref<8x128xf32, #tpu.memory_space<vmem>>, vector<8x128xf32>,
    } else {
    }
    %true = arith.constant true
    %33 = arith.xori %30, %true : i1
    %34 = arith.extui %33 : i1 to i32
    %c0_i32_14 = arith.constant 0 : i32
    %35 = arith.cmpi ne, %34, %c0_i32_14 : i32
    scf.if %35 {
      %39 = tpu.iota {dimensions = array<i32: 0>} : vector<2x8x128xi32>
      %40 = tpu.iota {dimensions = array<i32: 1>} : vector<2x8x128xi32>
      %41 = tpu.iota {dimensions = array<i32: 2>} : vector<2x8x128xi32>
      %c8_i32 = arith.constant 8 : i32
      %42 = vector.broadcast %c8_i32 : i32 to vector<2x8x128xi32>
      %43 = arith.muli %39, %42 : vector<2x8x128xi32>
      %44 = arith.addi %43, %40 : vector<2x8x128xi32>
      %c128_i32 = arith.constant 128 : i32
      %45 = vector.broadcast %c128_i32 : i32 to vector<2x8x128xi32>
      %46 = arith.muli %44, %45 : vector<2x8x128xi32>
      %47 = arith.addi %46, %41 : vector<2x8x128xi32>
      %c0_17 = arith.constant 0 : index
      %c0_18 = arith.constant 0 : index
      %48 = vector.load %arg5[%c0_17, %c0_18] : memref<8x128xf32, #tpu.memory_space<vmem>>, vector<8x128xf32>
      %49 = vector.broadcast %29 : i32 to vector<2x8x128xi32>
      %50 = arith.cmpi slt, %47, %49 : vector<2x8x128xi32>
      %cst_19 = arith.constant 0.000000e+00 : f32
      %51 = vector.broadcast %cst_19 : f32 to vector<2x8x128xf32>
      %52 = arith.select %50, %25, %51 : vector<2x8x128xi1>, vector<2x8x128xf32>
      %cst_20 = arith.constant dense<0.000000e+00> : vector<8x128xf32>
      %53 = vector.multi_reduction <add>, %52, %cst_20 [0] : vector<2x8x128xf32> to vector<8x128xf32>
      %54 = arith.addf %48, %53 : vector<8x128xf32>
      %c0_21 = arith.constant 0 : index
      %c0_22 = arith.constant 0 : index
      %55 = vector.load %arg5[%c0_21, %c0_22] : memref<8x128xf32, #tpu.memory_space<vmem>>, vector<8x128xf32>
      tpu.vector_store %arg5[%c0_21, %c0_22], %54 {strides = array<i32>} : memref<8x128xf32, #tpu.memory_space<vmem>>, vector<8x128xf32>,
    } else {
    }
    %c0_i32_15 = arith.constant 0 : i32
    %36 = arith.cmpi eq, %arg1, %c0_i32_15 : i32
    %37 = arith.extui %36 : i1 to i32
    %c0_i32_16 = arith.constant 0 : i32
    %38 = arith.cmpi ne, %37, %c0_i32_16 : i32
    scf.if %38 {
      %c0_17 = arith.constant 0 : index
      %c0_18 = arith.constant 0 : index
      %39 = vector.load %arg5[%c0_17, %c0_18] : memref<8x128xf32, #tpu.memory_space<vmem>>, vector<8x128xf32>
      %cst_19 = arith.constant dense<0.000000e+00> : vector<128xf32>
      %40 = vector.multi_reduction <add>, %39, %cst_19 [0] : vector<8x128xf32> to vector<128xf32>
      %41 = vector.shape_cast %40 : vector<128xf32> to vector<1x128xf32>
      %42 = vector.shape_cast %41 : vector<1x128xf32> to vector<1x1x128xf32>
      %c0_20 = arith.constant 0 : index
      %c0_21 = arith.constant 0 : index
      %c0_22 = arith.constant 0 : index
      %43 = vector.load %arg4[%c0_20, %c0_21, %c0_22] : memref<1x1x128xf32, #tpu.memory_space<vmem>>, vector<1x1x128xf32>
      tpu.vector_store %arg4[%c0_20, %c0_21, %c0_22], %42 {strides = array<i32>} : memref<1x1x128xf32, #tpu.memory_space<vmem>>, vector<1x1x128xf32>,
    } else {
    }
    return
  }
  func.func @transform_0(%arg0: i32, %arg1: i32) -> (i32, i32, i32) {
    %c1_i32 = arith.constant 1 : i32
    %0 = arith.muli %arg0, %c1_i32 : i32
    %1 = arith.addi %0, %arg1 : i32
    %c0_i32 = arith.constant 0 : i32
    %2 = arith.minsi %1, %c0_i32 : i32
    %c0_i32_0 = arith.constant 0 : i32
    %c0_i32_1 = arith.constant 0 : i32
    %c0_i32_2 = arith.constant 0 : i32
    return %2, %c0_i32_0, %c0_i32_1 : i32, i32, i32
  }
  func.func @transform_1(%arg0: i32, %arg1: i32) -> (i32, i32, i32) {
    %c1_i32 = arith.constant 1 : i32
    %0 = arith.muli %arg0, %c1_i32 : i32
    %1 = arith.addi %0, %arg1 : i32
    %c0_i32 = arith.constant 0 : i32
    %2 = arith.minsi %1, %c0_i32 : i32
    %c0_i32_0 = arith.constant 0 : i32
    %c0_i32_1 = arith.constant 0 : i32
    %c0_i32_2 = arith.constant 0 : i32
    return %2, %c0_i32_0, %c0_i32_1 : i32, i32, i32
  }
  func.func @transform_2(%arg0: i32, %arg1: i32) -> (i32, i32, i32) {
    %c0_i32 = arith.constant 0 : i32
    %c0_i32_0 = arith.constant 0 : i32
    %c0_i32_1 = arith.constant 0 : i32
    return %arg0, %c0_i32, %c0_i32_0 : i32, i32, i32
  }
}

</mosaic_0001>

<llo_original>
// kernel: tpu_custom_call.1
$region0: #{tpu_custom_call.1}
  #allocation0 [shape = 'u32[]', space=smem, size = 0x4, offset = 0x4, fixed_abs, tag = 'smem constant byte address 0x4 - core index']
  #allocation1 [shape = 'u32[144,128]{1,0:T(1,128)}', space=vmem, size = 0x12000, scoped, tag = 'internal scratch']
  #allocation2 [shape = 'f32[8,128]{1,0:T(8,128)}', space=vmem, size = 0x1000, scoped, tag = 'scratch operand']
  %s0 = inlined_call_operand.hbm [shape: f32[2,8,128], index: 0, kind: input, shape index: {}]
  %s1 = inlined_call_operand.hbm [shape: f32[2,8,128], index: 1, kind: input, shape index: {}]
  %s2 = inlined_call_operand.hbm [shape: f32[1,1,128], index: 2, kind: output, shape index: {}]
  %s3 = sld [smem:[#allocation0]]
  $region42: #{tpu_custom_call.1} parent=0
    _
  %s5 = ssub.s32 1, %s3
  %s6 = scalar_select 0, %s5, %s3
  $region1: #{tpu_custom_call.1} parent=0
    #allocation3 [shape = 'u8[8192]{0}', space=vmem, size = 0x2000, scoped, tag = 'input window, operand 0, single buffered']
    #allocation4 [shape = 's32[1]{0}', space=sflag, size = 0x4, scoped, tag = 'scoped memory for tpu_custom_call.1']
    #allocation5 [shape = 's32[1]{0}', space=sflag, size = 0x4, scoped, tag = 'scoped memory for tpu_custom_call.1']
    #allocation6 [shape = 'u8[8192]{0}', space=vmem, size = 0x2000, scoped, tag = 'input window, operand 1, single buffered']
    #allocation7 [shape = 's32[1]{0}', space=sflag, size = 0x4, scoped, tag = 'scoped memory for tpu_custom_call.1']
    #allocation8 [shape = 'u8[512]{0}', space=vmem, size = 0x400, scoped, tag = 'output window, operand 0, single buffered']
    %7 = vsyncpa [#allocation4], 0
    %8 = vsyncpa [#allocation7], 0
    %9 = vsyncpa [#allocation5], 0
    // Predicated region
    $region2: #{tpu_custom_call.1} parent=1 // pred_check
      _
    $region3: #{tpu_custom_call.1} parent=1 // pred_check_branch
      %11 = sbr.rel (0) target = $region5
    $region4: #{tpu_custom_call.1} parent=1 // pred_region
      %s12 = sadd.s32 0, 0
      %p13 = scmp.lt.s32.totalorder %s12, 0
      %s14 = scalar_select %p13, %s12, 0
      %s15 = smul.u32 2, %s14
      %s17 = ssub.s32 256, 256
      %18 = vsyncadd [#allocation4], %s17
      %s19 = smul.addr %s15, 128
      %s20 = scalar_lea.hbm %s0, %s19
      %s21 = sshll.u32 [#allocation3], 4
      %s22 = int_to_ptr.vmem [resolvable:$true] %s21
      %27 = dma.hbm_to_vmem [thread:$0]  %s20, 256, %s22, [#allocation4], 128, 128, 8
    $region5: #{tpu_custom_call.1} parent=1 // pred_fallthru
      _
    // Predicated region
    $region6: #{tpu_custom_call.1} parent=1 // pred_check
      _
    $region7: #{tpu_custom_call.1} parent=1 // pred_check_branch
      %29 = sbr.rel (0) target = $region9
    $region8: #{tpu_custom_call.1} parent=1 // pred_region
      %s30 = sadd.s32 0, 0
      %p31 = scmp.lt.s32.totalorder %s30, 0
      %s32 = scalar_select %p31, %s30, 0
      %s33 = smul.u32 2, %s32
      %s35 = ssub.s32 256, 256
      %36 = vsyncadd [#allocation7], %s35
      %s37 = smul.addr %s33, 128
      %s38 = scalar_lea.hbm %s1, %s37
      %s39 = sshll.u32 [#allocation6], 4
      %s40 = int_to_ptr.vmem [resolvable:$true] %s39
      %45 = dma.hbm_to_vmem [thread:$0]  %s38, 256, %s40, [#allocation7], 128, 128, 8
    $region9: #{tpu_custom_call.1} parent=1 // pred_fallthru
      _
    // Predicated region
    $region10: #{tpu_custom_call.1} parent=1 // pred_check
      _
    $region11: #{tpu_custom_call.1} parent=1 // pred_check_branch
      %47 = sbr.rel (0) target = $region13
    $region12: #{tpu_custom_call.1} parent=1 // pred_region
      %48 = dma.done [#allocation4], 256
    $region13: #{tpu_custom_call.1} parent=1 // pred_fallthru
      _
    // Predicated region
    $region14: #{tpu_custom_call.1} parent=1 // pred_check
      _
    $region15: #{tpu_custom_call.1} parent=1 // pred_check_branch
      %50 = sbr.rel (0) target = $region17
    $region16: #{tpu_custom_call.1} parent=1 // pred_region
      %51 = dma.done [#allocation7], 256
    $region17: #{tpu_custom_call.1} parent=1 // pred_fallthru
      _
    %s52 = sadd.s32 0, 0
    %p53 = scmp.lt.s32.totalorder %s52, 0
    %s54 = scalar_select %p53, %s52, 0
    %s55 = smul.u32 2, %s54
    %s56 = sadd.s32 0, 0
    %p57 = scmp.lt.s32.totalorder %s56, 0
    %s58 = scalar_select %p57, %s56, 0
    %s59 = smul.u32 2, %s58
    %p60 = scmp.eq.s32.totalorder 0, 0
    // Predicated region
    $region18: #{tpu_custom_call.1} parent=1 // pred_check
      %p61 = pneg %p60
    $region19: #{tpu_custom_call.1} parent=1 // pred_check_branch
      %63 = sbr.rel (%p61) target = $region21
    $region20: #{tpu_custom_call.1} parent=1 // pred_region
      %64 = vst [vmem:[#allocation2] sm:$0xff] 0.0
    $region21: #{tpu_custom_call.1} parent=1 // pred_fallthru
      _
    %v65 = vld [vmem:[#allocation3] sm:$0xff]
    %v66 = vld [vmem:[#allocation3 + $0x8] sm:$0xff]
    %v67 = vld [vmem:[#allocation6] sm:$0xff]
    %v68 = vld [vmem:[#allocation6 + $0x8] sm:$0xff]
    %v69 = vmax.f32 %v65, 0.0
    %v70 = vmax.f32 %v66, 0.0
    %v71 = vand.u32 2147483647, %v65
    %v72 = vand.u32 2147483647, %v66
    %v73 = vsub.f32 0.0, %v71
    %v74 = vsub.f32 0.0, %v72
    %v75 = vmul.f32 %v73, 1.442695
    %v76 = vpow.pop %v75
    %v77 = vmul.f32 %v74, 1.442695
    %v78 = vpow.pop %v77
    %v79 = vadd.f32 %v76, 1.0
    %v80 = vlog2.pop %v79
    %v81 = vmul.f32 %v80, 0.6931472
    %v82 = vmul.f32 -0.5, %v76
    %v83 = vadd.f32 %v82, 1.0
    %v84 = vmul.f32 %v83, %v76
    %v85 = vand.u32 2147483647, %v76
    %vm86 = vcmp.lt.f32.partialorder %v85, 0.0004427343
    %v87 = vsel %vm86, %v84, %v81
    %v88 = vadd.f32 %v78, 1.0
    %v89 = vlog2.pop %v88
    %v90 = vmul.f32 %v89, 0.6931472
    %v91 = vmul.f32 -0.5, %v78
    %v92 = vadd.f32 %v91, 1.0
    %v93 = vmul.f32 %v92, %v78
    %v94 = vand.u32 2147483647, %v78
    %vm95 = vcmp.lt.f32.partialorder %v94, 0.0004427343
    %v96 = vsel %vm95, %v93, %v90
    %v97 = vsub.f32 %v65, %v69
    %v98 = vsub.f32 %v66, %v70
    %v99 = vsub.f32 %v97, %v87
    %v100 = vsub.f32 %v98, %v96
    %v101 = vmax.f32 %v99, -100.0
    %v102 = vmax.f32 %v100, -100.0
    %v103 = vsub.f32 0.0, %v69
    %v104 = vsub.f32 0.0, %v70
    %v105 = vsub.f32 %v103, %v87
    %v106 = vsub.f32 %v104, %v96
    %v107 = vmax.f32 %v105, -100.0
    %v108 = vmax.f32 %v106, -100.0
    %v109 = vsub.f32 %v101, %v107
    %v110 = vsub.f32 %v102, %v108
    %v111 = vmul.f32 %v67, %v109
    %v112 = vmul.f32 %v68, %v110
    %v113 = vadd.f32 %v107, %v111
    %v114 = vadd.f32 %v108, %v112
    %v115 = vsub.f32 0.0, %v113
    %v116 = vsub.f32 0.0, %v114
    %s117 = sadd.s32 0, 0
    %s118 = smul.u32 %s117, 2048
    %s119 = ssub.s32 2048, %s118
    %p120 = scmp.ge.s32.totalorder %s119, 2048
    // Predicated region
    $region22: #{tpu_custom_call.1} parent=1 // pred_check
      %p121 = pneg %p120
    $region23: #{tpu_custom_call.1} parent=1 // pred_check_branch
      %123 = sbr.rel (%p121) target = $region25
    $region24: #{tpu_custom_call.1} parent=1 // pred_region
      %v124 = vld [vmem:[#allocation2] sm:$0xff]
      %v125 = vadd.f32 %v115, %v116
      %v126 = vadd.f32 %v124, %v125
      %127 = vst [vmem:[#allocation2] sm:$0xff] %v126
    $region25: #{tpu_custom_call.1} parent=1 // pred_fallthru
      _
    %p128 = scmp.lt.s32.totalorder %s119, 2048
    // Predicated region
    $region26: #{tpu_custom_call.1} parent=1 // pred_check
      %p129 = pneg %p128
    $region27: #{tpu_custom_call.1} parent=1 // pred_check_branch
      %131 = sbr.rel (%p129) target = $region29
    $region28: #{tpu_custom_call.1} parent=1 // pred_region
      %v132 = vlaneseq
      %v133 = vshrl.u32 %v132, 7
      %v134 = vlaneseq
      %v135 = vand.u32 %v134, 127
      %v136 = vadd.s32 %v133, 8
      %v137 = vmul.u32 %v133, 128
      %v138 = vmul.u32 %v136, 128
      %v139 = vadd.s32 %v137, %v135
      %v140 = vadd.s32 %v138, %v135
      %v141 = vld [vmem:[#allocation2] sm:$0xff]
      %v142 = vstv %s119
      %vm143 = vcmp.lt.s32.totalorder %v139, %v142
      %vm144 = vcmp.lt.s32.totalorder %v140, %v142
      %v145 = vsel %vm143, %v115, 0.0
      %v146 = vsel %vm144, %v116, 0.0
      %v147 = vadd.f32 %v145, %v146
      %v148 = vadd.f32 %v141, %v147
      %149 = vst [vmem:[#allocation2] sm:$0xff] %v148
    $region29: #{tpu_custom_call.1} parent=1 // pred_fallthru
      _
    // Predicated region
    $region30: #{tpu_custom_call.1} parent=1 // pred_check
      %p150 = pneg %p60
    $region31: #{tpu_custom_call.1} parent=1 // pred_check_branch
      %152 = sbr.rel (%p150) target = $region33
    $region32: #{tpu_custom_call.1} parent=1 // pred_region
      %v153 = vld [vmem:[#allocation2] sm:$0xff]
      %v154 = vrot.slane %v153, 4
      %v155 = vadd.f32 %v153, %v154
      %v156 = vrot.slane %v155, 2
      %v157 = vadd.f32 %v155, %v156
      %v158 = vrot.slane %v157, 1
      %v159 = vadd.f32 %v157, %v158
      %160 = vst [vmem:[#allocation8] sm:$0x1] %v159
    $region33: #{tpu_custom_call.1} parent=1 // pred_fallthru
      _
    // Predicated region
    $region34: #{tpu_custom_call.1} parent=1 // pred_check
      _
    $region35: #{tpu_custom_call.1} parent=1 // pred_check_branch
      %162 = sbr.rel (0) target = $region37
    $region36: #{tpu_custom_call.1} parent=1 // pred_region
      %s164 = ssub.s32 16, 16
      %165 = vsyncadd [#allocation5], %s164
      %s167 = sshll.u32 [#allocation8], 4
      %s168 = int_to_ptr.vmem [resolvable:$true] %s167
      %170 = dma.vmem_to_hbm [thread:$0]  %s168, 16, %s2, [#allocation5]
    $region37: #{tpu_custom_call.1} parent=1 // pred_fallthru
      _
    // Predicated region
    $region38: #{tpu_custom_call.1} parent=1 // pred_check
      _
    $region39: #{tpu_custom_call.1} parent=1 // pred_check_branch
      %172 = sbr.rel (0) target = $region41
    $region40: #{tpu_custom_call.1} parent=1 // pred_region
      %173 = dma.done [#allocation5], 16
    $region41: #{tpu_custom_call.1} parent=1 // pred_fallthru
      _
    %174 = vsyncpa [#allocation4], 1
    %175 = vsyncpa [#allocation7], 1
    %176 = vsyncpa [#allocation5], 1

</llo_original>
